<compile_context>
chip_gen: v7x
topology: tpu7x:2x2x1
jax: 0.10.0
libtpu: 0.0.40
codegen_flags: <defaults>
</compile_context>

<pallas_src>
import functools

import jax
import jax.numpy as jnp
import numpy as np
from jax.experimental import pallas as pl
from jax.experimental.pallas import tpu as pltpu

_LANE = 128
_SUBLANE = 8
_MAX_TILE_ROWS = 4096      # 4096 * 128 * 4 B = 2 MiB per input block
_ACC_ROWS = 64             # 8 vregs per accumulator -> 8-way ILP in the fold


def _round_up(x, m):
    return -(-x // m) * m


def _max_square_kernel(x_ref, sum_ref, cnt_ref, sum_acc, cnt_acc, *,
                       ignore_index, rows, tile_rows, acc_rows,
                       blocks_per_core):
    """One grid step: fold a (tile_rows, 128) tile into per-core accumulators.

    x_ref   : (tile_rows, 128) lane-dense tile of the flattened prob tensor
    sum_ref : (8, 128) per-core partial sum of masked prob**2  (f32)
    cnt_ref : (8, 128) per-core partial count of unmasked elems (int32, exact)
    sum_acc : (acc_rows, 128) f32 VMEM scratch
    cnt_acc : (acc_rows, 128) int32 VMEM scratch
    """
    c = pl.program_id(0)            # parallel (per-core) axis
    i = pl.program_id(1)            # streaming reduction axis

    @pl.when(i == 0)
    def _init():
        sum_acc[...] = jnp.zeros_like(sum_acc)
        cnt_acc[...] = jnp.zeros_like(cnt_acc)

    # Unclamped global row offset of this step.  The input index_map clamps
    # the block index into range, so a fully out-of-range step re-reads the
    # last real block; its contribution is masked to zero below.
    row_start = (c * blocks_per_core + i) * tile_rows

    p = x_ref[...].astype(jnp.float32)                 # (tile_rows, 128)
    value_mask = p != jnp.float32(ignore_index)

    def _accumulate(valid):
        sq = jnp.where(valid, p * p, 0.0)
        ones = jnp.where(valid, jnp.int32(1), jnp.int32(0))
        # Tile-aligned fold (acc_rows is a multiple of 8): pure VPU vreg adds,
        # acc_rows/8 independent chains, no per-step XLU work.
        sum_acc[...] += sq.reshape(-1, acc_rows, _LANE).sum(axis=0)
        cnt_acc[...] += ones.reshape(-1, acc_rows, _LANE).sum(axis=0)

    fully_valid = row_start + tile_rows <= rows

    @pl.when(fully_valid)
    def _bulk():                                       # steady state: no iota
        _accumulate(value_mask)

    @pl.when(jnp.logical_not(fully_valid))
    def _ragged():                                     # last / duplicate tile
        local_row = jax.lax.broadcasted_iota(jnp.int32, (tile_rows, _LANE), 0)
        row_ok = (row_start + local_row) < rows
        _accumulate(jnp.logical_and(value_mask, row_ok))

    @pl.when(i == pl.num_programs(1) - 1)
    def _finalize():
        sum_ref[...] = sum_acc[...].reshape(-1, _SUBLANE, _LANE).sum(axis=0)
        cnt_ref[...] = cnt_acc[...].reshape(-1, _SUBLANE, _LANE).sum(axis=0)


def max_square_loss(pred, prob, ignore_index=-1):
    """Pallas implementation of MaxSquareloss.forward(pred, prob)."""
    del pred  # unused by the PyTorch forward

    total = int(np.prod(prob.shape))
    if total == 0:
        return jnp.float32(float("nan"))   # mean over empty selection

    flat = prob.reshape(-1)                # free reshape (contiguous)
    rem = total % _LANE
    if rem:
        # TODO(synk): this rare fallback (numel % 128 != 0) still materializes
        # a padded copy; only the sub-128 remainder actually needs padding.
        flat = jnp.pad(flat, (0, _LANE - rem), constant_values=ignore_index)
    rows = flat.shape[0] // _LANE          # == ceil(total / 128)
    x2d = flat.reshape(rows, _LANE)        # free reshape, lane-dense layout

    if rows <= _MAX_TILE_ROWS:
        tile_rows = _round_up(rows, 16)    # single grid step, bf16-safe sublanes
    else:
        tile_rows = _MAX_TILE_ROWS
    n_blocks = -(-rows // tile_rows)
    n_cores = 2 if n_blocks >= 2 else 1    # v7x megacore split; loop elsewhere
    blocks_per_core = -(-n_blocks // n_cores)
    acc_rows = _ACC_ROWS if tile_rows % _ACC_ROWS == 0 else 16
    last_block = n_blocks - 1

    kernel = functools.partial(
        _max_square_kernel, ignore_index=ignore_index, rows=rows,
        tile_rows=tile_rows, acc_rows=acc_rows,
        blocks_per_core=blocks_per_core)

    sum_part, cnt_part = pl.pallas_call(
        kernel,
        out_shape=(
            jax.ShapeDtypeStruct((n_cores * _SUBLANE, _LANE), jnp.float32),
            jax.ShapeDtypeStruct((n_cores * _SUBLANE, _LANE), jnp.int32),
        ),
        grid_spec=pltpu.PrefetchScalarGridSpec(
            num_scalar_prefetch=0,
            grid=(n_cores, blocks_per_core),
            in_specs=[pl.BlockSpec(
                (tile_rows, _LANE),
                lambda c, i: (jnp.minimum(c * blocks_per_core + i, last_block),
                              0))],
            out_specs=(
                pl.BlockSpec((_SUBLANE, _LANE), lambda c, i: (c, 0)),
                pl.BlockSpec((_SUBLANE, _LANE), lambda c, i: (c, 0)),
            ),
            scratch_shapes=[
                pltpu.VMEM((acc_rows, _LANE), jnp.float32),  # sum(prob^2*mask)
                pltpu.VMEM((acc_rows, _LANE), jnp.int32),    # count(mask)
            ],
        ),
        compiler_params=pltpu.CompilerParams(
            dimension_semantics=("parallel", "arbitrary")),
    )(x2d)

    s = jnp.sum(sum_part)                              # scalar f32
    cnt = jnp.sum(cnt_part).astype(jnp.float32)        # exact integer count
    return -(s / cnt) * 0.5


def _reference(prob, ignore_index=-1):
    """Pure-JAX reference reproducing the PyTorch forward."""
    mask = prob != ignore_index
    sq = jnp.square(prob)
    mean_masked = jnp.sum(jnp.where(mask, sq, 0.0)) / jnp.sum(
        mask.astype(jnp.float32))
    return -mean_masked / 2.0


if __name__ == "__main__":
    # MaxSquareloss(ignore_index=-1, num_class=19); pred/prob: (N, C, H, W)
    N, C, H, W = 2, 19, 16, 16
    ignore_index = -1

    key = jax.random.PRNGKey(0)
    k_pred, k_mask = jax.random.split(key)

    pred = jax.random.normal(k_pred, (N, C, H, W), dtype=jnp.float32)
    prob = jax.nn.softmax(pred, axis=1)
    # Mark ~10% of entries as ignored so the mask path is actually exercised.
    ignore_mask = jax.random.bernoulli(k_mask, 0.1, (N, C, H, W))
    prob = jnp.where(ignore_mask, jnp.float32(ignore_index), prob)

    loss = max_square_loss(pred, prob, ignore_index=ignore_index)
    loss = jax.block_until_ready(loss)

    ref = _reference(prob, ignore_index=ignore_index)
    np.testing.assert_allclose(np.asarray(loss), np.asarray(ref),
                               rtol=1e-5, atol=1e-6)

    print("KERNEL_OK")
</pallas_src>

<mosaic_0001>
module attributes {stable_mosaic.version = 11 : i64} {
  func.func @_max_square_kernel(%arg0: i32, %arg1: i32, %arg2: memref<80x128xf32, #tpu.memory_space<vmem>>, %arg3: memref<8x128xf32, #tpu.memory_space<vmem>>, %arg4: memref<8x128xi32, #tpu.memory_space<vmem>>, %arg5: memref<16x128xf32, #tpu.memory_space<vmem>>, %arg6: memref<16x128xi32, #tpu.memory_space<vmem>>) attributes {dimension_semantics = [#tpu.dimension_semantics<parallel>, #tpu.dimension_semantics<arbitrary>], iteration_bounds = array<i64: 1, 1>, scalar_prefetch = 0 : i64, scratch_operands = 2 : i64, tpu.core_type = #tpu.core_type<tc>, window_params = [{transform_indices = @transform_0, window_bounds = array<i64: 80, 128>}, {transform_indices = @transform_1, window_bounds = array<i64: 8, 128>}, {transform_indices = @transform_2, window_bounds = array<i64: 8, 128>}]} {
    %c0_i32 = arith.constant 0 : i32
    %0 = arith.cmpi eq, %arg1, %c0_i32 : i32
    %1 = arith.extui %0 : i1 to i32
    %c0_i32_0 = arith.constant 0 : i32
    %2 = arith.cmpi ne, %1, %c0_i32_0 : i32
    scf.if %2 {
      %cst_7 = arith.constant 0.000000e+00 : f32
      %19 = vector.broadcast %cst_7 : f32 to vector<16x128xf32>
      %c0_8 = arith.constant 0 : index
      %c0_9 = arith.constant 0 : index
      %20 = vector.load %arg5[%c0_8, %c0_9] : memref<16x128xf32, #tpu.memory_space<vmem>>, vector<16x128xf32>
      tpu.vector_store %arg5[%c0_8, %c0_9], %19 {strides = array<i32>} : memref<16x128xf32, #tpu.memory_space<vmem>>, vector<16x128xf32>,
      %c0_i32_10 = arith.constant 0 : i32
      %21 = vector.broadcast %c0_i32_10 : i32 to vector<16x128xi32>
      %c0_11 = arith.constant 0 : index
      %c0_12 = arith.constant 0 : index
      %22 = vector.load %arg6[%c0_11, %c0_12] : memref<16x128xi32, #tpu.memory_space<vmem>>, vector<16x128xi32>
      tpu.vector_store %arg6[%c0_11, %c0_12], %21 {strides = array<i32>} : memref<16x128xi32, #tpu.memory_space<vmem>>, vector<16x128xi32>,
    } else {
    }
    %c1_i32 = arith.constant 1 : i32
    %3 = arith.muli %arg0, %c1_i32 : i32
    %4 = arith.addi %3, %arg1 : i32
    %c80_i32 = arith.constant 80 : i32
    %5 = arith.muli %4, %c80_i32 : i32
    %c0 = arith.constant 0 : index
    %c0_1 = arith.constant 0 : index
    %6 = vector.load %arg2[%c0, %c0_1] : memref<80x128xf32, #tpu.memory_space<vmem>>, vector<80x128xf32>
    %cst = arith.constant -1.000000e+00 : f32
    %7 = vector.broadcast %cst : f32 to vector<80x128xf32>
    %8 = arith.cmpf one, %6, %7 : vector<80x128xf32>
    %c80_i32_2 = arith.constant 80 : i32
    %9 = arith.addi %5, %c80_i32_2 : i32
    %c76_i32 = arith.constant 76 : i32
    %10 = arith.cmpi sle, %9, %c76_i32 : i32
    %11 = arith.extui %10 : i1 to i32
    %c0_i32_3 = arith.constant 0 : i32
    %12 = arith.cmpi ne, %11, %c0_i32_3 : i32
    scf.if %12 {
      %19 = arith.mulf %6, %6 : vector<80x128xf32>
      %cst_7 = arith.constant 0.000000e+00 : f32
      %20 = vector.broadcast %cst_7 : f32 to vector<80x128xf32>
      %21 = arith.select %8, %19, %20 : vector<80x128xi1>, vector<80x128xf32>
      %c1_i32_8 = arith.constant 1 : i32
      %c0_i32_9 = arith.constant 0 : i32
      %22 = vector.broadcast %c1_i32_8 : i32 to vector<80x128xi32>
      %23 = vector.broadcast %c0_i32_9 : i32 to vector<80x128xi32>
      %24 = arith.select %8, %22, %23 : vector<80x128xi1>, vector<80x128xi32>
      %c0_10 = arith.constant 0 : index
      %c0_11 = arith.constant 0 : index
      %25 = vector.load %arg5[%c0_10, %c0_11] : memref<16x128xf32, #tpu.memory_space<vmem>>, vector<16x128xf32>
      %26 = vector.shape_cast %21 : vector<80x128xf32> to vector<5x16x128xf32>
      %cst_12 = arith.constant dense<0.000000e+00> : vector<16x128xf32>
      %27 = vector.multi_reduction <add>, %26, %cst_12 [0] : vector<5x16x128xf32> to vector<16x128xf32>
      %28 = arith.addf %25, %27 : vector<16x128xf32>
      %c0_13 = arith.constant 0 : index
      %c0_14 = arith.constant 0 : index
      %29 = vector.load %arg5[%c0_13, %c0_14] : memref<16x128xf32, #tpu.memory_space<vmem>>, vector<16x128xf32>
      tpu.vector_store %arg5[%c0_13, %c0_14], %28 {strides = array<i32>} : memref<16x128xf32, #tpu.memory_space<vmem>>, vector<16x128xf32>,
      %c0_15 = arith.constant 0 : index
      %c0_16 = arith.constant 0 : index
      %30 = vector.load %arg6[%c0_15, %c0_16] : memref<16x128xi32, #tpu.memory_space<vmem>>, vector<16x128xi32>
      %31 = vector.shape_cast %24 : vector<80x128xi32> to vector<5x16x128xi32>
      %cst_17 = arith.constant dense<0> : vector<16x128xi32>
      %32 = vector.multi_reduction <add>, %31, %cst_17 [0] : vector<5x16x128xi32> to vector<16x128xi32>
      %33 = arith.addi %30, %32 : vector<16x128xi32>
      %c0_18 = arith.constant 0 : index
      %c0_19 = arith.constant 0 : index
      %34 = vector.load %arg6[%c0_18, %c0_19] : memref<16x128xi32, #tpu.memory_space<vmem>>, vector<16x128xi32>
      tpu.vector_store %arg6[%c0_18, %c0_19], %33 {strides = array<i32>} : memref<16x128xi32, #tpu.memory_space<vmem>>, vector<16x128xi32>,
    } else {
    }
    %true = arith.constant true
    %13 = arith.xori %10, %true : i1
    %14 = arith.extui %13 : i1 to i32
    %c0_i32_4 = arith.constant 0 : i32
    %15 = arith.cmpi ne, %14, %c0_i32_4 : i32
    scf.if %15 {
      %19 = tpu.iota {dimensions = array<i32: 0>} : vector<80x128xi32>
      %20 = vector.broadcast %5 : i32 to vector<80x128xi32>
      %21 = arith.addi %20, %19 : vector<80x128xi32>
      %c76_i32_7 = arith.constant 76 : i32
      %22 = vector.broadcast %c76_i32_7 : i32 to vector<80x128xi32>
      %23 = arith.cmpi slt, %21, %22 : vector<80x128xi32>
      %24 = arith.andi %8, %23 : vector<80x128xi1>
      %25 = arith.mulf %6, %6 : vector<80x128xf32>
      %cst_8 = arith.constant 0.000000e+00 : f32
      %26 = vector.broadcast %cst_8 : f32 to vector<80x128xf32>
      %27 = arith.select %24, %25, %26 : vector<80x128xi1>, vector<80x128xf32>
      %c1_i32_9 = arith.constant 1 : i32
      %c0_i32_10 = arith.constant 0 : i32
      %28 = vector.broadcast %c1_i32_9 : i32 to vector<80x128xi32>
      %29 = vector.broadcast %c0_i32_10 : i32 to vector<80x128xi32>
      %30 = arith.select %24, %28, %29 : vector<80x128xi1>, vector<80x128xi32>
      %c0_11 = arith.constant 0 : index
      %c0_12 = arith.constant 0 : index
      %31 = vector.load %arg5[%c0_11, %c0_12] : memref<16x128xf32, #tpu.memory_space<vmem>>, vector<16x128xf32>
      %32 = vector.shape_cast %27 : vector<80x128xf32> to vector<5x16x128xf32>
      %cst_13 = arith.constant dense<0.000000e+00> : vector<16x128xf32>
      %33 = vector.multi_reduction <add>, %32, %cst_13 [0] : vector<5x16x128xf32> to vector<16x128xf32>
      %34 = arith.addf %31, %33 : vector<16x128xf32>
      %c0_14 = arith.constant 0 : index
      %c0_15 = arith.constant 0 : index
      %35 = vector.load %arg5[%c0_14, %c0_15] : memref<16x128xf32, #tpu.memory_space<vmem>>, vector<16x128xf32>
      tpu.vector_store %arg5[%c0_14, %c0_15], %34 {strides = array<i32>} : memref<16x128xf32, #tpu.memory_space<vmem>>, vector<16x128xf32>,
      %c0_16 = arith.constant 0 : index
      %c0_17 = arith.constant 0 : index
      %36 = vector.load %arg6[%c0_16, %c0_17] : memref<16x128xi32, #tpu.memory_space<vmem>>, vector<16x128xi32>
      %37 = vector.shape_cast %30 : vector<80x128xi32> to vector<5x16x128xi32>
      %cst_18 = arith.constant dense<0> : vector<16x128xi32>
      %38 = vector.multi_reduction <add>, %37, %cst_18 [0] : vector<5x16x128xi32> to vector<16x128xi32>
      %39 = arith.addi %36, %38 : vector<16x128xi32>
      %c0_19 = arith.constant 0 : index
      %c0_20 = arith.constant 0 : index
      %40 = vector.load %arg6[%c0_19, %c0_20] : memref<16x128xi32, #tpu.memory_space<vmem>>, vector<16x128xi32>
      tpu.vector_store %arg6[%c0_19, %c0_20], %39 {strides = array<i32>} : memref<16x128xi32, #tpu.memory_space<vmem>>, vector<16x128xi32>,
    } else {
    }
    %c0_i32_5 = arith.constant 0 : i32
    %16 = arith.cmpi eq, %arg1, %c0_i32_5 : i32
    %17 = arith.extui %16 : i1 to i32
    %c0_i32_6 = arith.constant 0 : i32
    %18 = arith.cmpi ne, %17, %c0_i32_6 : i32
    scf.if %18 {
      %c0_7 = arith.constant 0 : index
      %c0_8 = arith.constant 0 : index
      %19 = vector.load %arg5[%c0_7, %c0_8] : memref<16x128xf32, #tpu.memory_space<vmem>>, vector<16x128xf32>
      %20 = vector.shape_cast %19 : vector<16x128xf32> to vector<2x8x128xf32>
      %cst_9 = arith.constant dense<0.000000e+00> : vector<8x128xf32>
      %21 = vector.multi_reduction <add>, %20, %cst_9 [0] : vector<2x8x128xf32> to vector<8x128xf32>
      %c0_10 = arith.constant 0 : index
      %c0_11 = arith.constant 0 : index
      %22 = vector.load %arg3[%c0_10, %c0_11] : memref<8x128xf32, #tpu.memory_space<vmem>>, vector<8x128xf32>
      tpu.vector_store %arg3[%c0_10, %c0_11], %21 {strides = array<i32>} : memref<8x128xf32, #tpu.memory_space<vmem>>, vector<8x128xf32>,
      %c0_12 = arith.constant 0 : index
      %c0_13 = arith.constant 0 : index
      %23 = vector.load %arg6[%c0_12, %c0_13] : memref<16x128xi32, #tpu.memory_space<vmem>>, vector<16x128xi32>
      %24 = vector.shape_cast %23 : vector<16x128xi32> to vector<2x8x128xi32>
      %cst_14 = arith.constant dense<0> : vector<8x128xi32>
      %25 = vector.multi_reduction <add>, %24, %cst_14 [0] : vector<2x8x128xi32> to vector<8x128xi32>
      %c0_15 = arith.constant 0 : index
      %c0_16 = arith.constant 0 : index
      %26 = vector.load %arg4[%c0_15, %c0_16] : memref<8x128xi32, #tpu.memory_space<vmem>>, vector<8x128xi32>
      tpu.vector_store %arg4[%c0_15, %c0_16], %25 {strides = array<i32>} : memref<8x128xi32, #tpu.memory_space<vmem>>, vector<8x128xi32>,
    } else {
    }
    return
  }
  func.func @transform_0(%arg0: i32, %arg1: i32) -> (i32, i32) {
    %c1_i32 = arith.constant 1 : i32
    %0 = arith.muli %arg0, %c1_i32 : i32
    %1 = arith.addi %0, %arg1 : i32
    %c0_i32 = arith.constant 0 : i32
    %2 = arith.minsi %1, %c0_i32 : i32
    %c0_i32_0 = arith.constant 0 : i32
    %c0_i32_1 = arith.constant 0 : i32
    return %2, %c0_i32_0 : i32, i32
  }
  func.func @transform_1(%arg0: i32, %arg1: i32) -> (i32, i32) {
    %c0_i32 = arith.constant 0 : i32
    %c0_i32_0 = arith.constant 0 : i32
    return %arg0, %c0_i32 : i32, i32
  }
  func.func @transform_2(%arg0: i32, %arg1: i32) -> (i32, i32) {
    %c0_i32 = arith.constant 0 : i32
    %c0_i32_0 = arith.constant 0 : i32
    return %arg0, %c0_i32 : i32, i32
  }
}

</mosaic_0001>

<llo_original>
// kernel: tpu_custom_call.1
$region0: #{tpu_custom_call.1}
  #allocation0 [shape = 'u32[]', space=smem, size = 0x4, offset = 0x4, fixed_abs, tag = 'smem constant byte address 0x4 - core index']
  #allocation1 [shape = 'u32[144,128]{1,0:T(1,128)}', space=vmem, size = 0x12000, scoped, tag = 'internal scratch']
  #allocation2 [shape = 'f32[16,128]{1,0:T(8,128)}', space=vmem, size = 0x2000, scoped, tag = 'scratch operand']
  #allocation3 [shape = 's32[16,128]{1,0:T(8,128)}', space=vmem, size = 0x2000, scoped, tag = 'scratch operand']
  %s0 = inlined_call_operand.hbm [shape: f32[76,128], index: 0, kind: input, shape index: {}]
  %s1 = inlined_call_operand.hbm [shape: f32[8,128], index: 1, kind: output, shape index: {0}]
  %s2 = inlined_call_operand.hbm [shape: s32[8,128], index: 2, kind: output, shape index: {1}]
  %3 = xla_tuple %s1, %s2
  %s4 = sld [smem:[#allocation0]]
  $region42: #{tpu_custom_call.1} parent=0
    _
  %s6 = ssub.s32 1, %s4
  %s7 = scalar_select 0, %s6, %s4
  $region1: #{tpu_custom_call.1} parent=0
    #allocation4 [shape = 'u8[40960]{0}', space=vmem, size = 0xa000, scoped, tag = 'input window, operand 0, single buffered']
    #allocation5 [shape = 's32[1]{0}', space=sflag, size = 0x4, scoped, tag = 'scoped memory for tpu_custom_call.1']
    #allocation6 [shape = 's32[1]{0}', space=sflag, size = 0x4, scoped, tag = 'scoped memory for tpu_custom_call.1']
    #allocation7 [shape = 'u8[4096]{0}', space=vmem, size = 0x1000, scoped, tag = 'output window, operand 0, single buffered']
    #allocation8 [shape = 'u8[4096]{0}', space=vmem, size = 0x1000, scoped, tag = 'output window, operand 1, single buffered']
    #allocation9 [shape = 's32[1]{0}', space=sflag, size = 0x4, scoped, tag = 'scoped memory for tpu_custom_call.1']
    %8 = vsyncpa [#allocation5], 0
    %9 = vsyncpa [#allocation6], 0
    %10 = vsyncpa [#allocation9], 0
    // Predicated region
    $region2: #{tpu_custom_call.1} parent=1 // pred_check
      _
    $region3: #{tpu_custom_call.1} parent=1 // pred_check_branch
      %12 = sbr.rel (0) target = $region5
    $region4: #{tpu_custom_call.1} parent=1 // pred_region
      %s13 = sadd.s32 0, 0
      %p14 = scmp.lt.s32.totalorder %s13, 0
      %s15 = scalar_select %p14, %s13, 0
      %s16 = smul.u32 10, %s15
      %s18 = ssub.s32 1280, 1280
      %19 = vsyncadd [#allocation5], %s18
      %s20 = smul.addr %s16, 128
      %s21 = scalar_lea.hbm %s0, %s20
      %s22 = sshll.u32 [#allocation4], 4
      %s23 = int_to_ptr.vmem [resolvable:$true] %s22
      %28 = dma.hbm_to_vmem [thread:$0]  %s21, 1280, %s23, [#allocation5], 128, 128, 8
    $region5: #{tpu_custom_call.1} parent=1 // pred_fallthru
      _
    // Predicated region
    $region6: #{tpu_custom_call.1} parent=1 // pred_check
      _
    $region7: #{tpu_custom_call.1} parent=1 // pred_check_branch
      %30 = sbr.rel (0) target = $region9
    $region8: #{tpu_custom_call.1} parent=1 // pred_region
      %31 = dma.done [#allocation5], 1280
    $region9: #{tpu_custom_call.1} parent=1 // pred_fallthru
      _
    %s32 = sadd.s32 0, 0
    %p33 = scmp.lt.s32.totalorder %s32, 0
    %s34 = scalar_select %p33, %s32, 0
    %s35 = smul.u32 10, %s34
    %p36 = scmp.eq.s32.totalorder 0, 0
    // Predicated region
    $region10: #{tpu_custom_call.1} parent=1 // pred_check
      %p37 = pneg %p36
    $region11: #{tpu_custom_call.1} parent=1 // pred_check_branch
      %39 = sbr.rel (%p37) target = $region13
    $region12: #{tpu_custom_call.1} parent=1 // pred_region
      %40 = vst [vmem:[#allocation2] sm:$0xff] 0.0
      %41 = vst [vmem:[#allocation2 + $0x8] sm:$0xff] 0.0
      %42 = vst [vmem:[#allocation3] sm:$0xff] 0
      %43 = vst [vmem:[#allocation3 + $0x8] sm:$0xff] 0
    $region13: #{tpu_custom_call.1} parent=1 // pred_fallthru
      _
    %s44 = sadd.s32 0, 0
    %s45 = smul.u32 %s44, 80
    %v46 = vld [vmem:[#allocation4] sm:$0xff]
    %v47 = vld [vmem:[#allocation4 + $0x8] sm:$0xff]
    %v48 = vld [vmem:[#allocation4 + $0x10] sm:$0xff]
    %v49 = vld [vmem:[#allocation4 + $0x18] sm:$0xff]
    %v50 = vld [vmem:[#allocation4 + $0x20] sm:$0xff]
    %v51 = vld [vmem:[#allocation4 + $0x28] sm:$0xff]
    %v52 = vld [vmem:[#allocation4 + $0x30] sm:$0xff]
    %v53 = vld [vmem:[#allocation4 + $0x38] sm:$0xff]
    %v54 = vld [vmem:[#allocation4 + $0x40] sm:$0xff]
    %v55 = vld [vmem:[#allocation4 + $0x48] sm:$0xff]
    %vm56 = vcmp.ne.f32.partialorder %v46, -1.0
    %vm57 = vcmp.ne.f32.partialorder %v47, -1.0
    %vm58 = vcmp.ne.f32.partialorder %v48, -1.0
    %vm59 = vcmp.ne.f32.partialorder %v49, -1.0
    %vm60 = vcmp.ne.f32.partialorder %v50, -1.0
    %vm61 = vcmp.ne.f32.partialorder %v51, -1.0
    %vm62 = vcmp.ne.f32.partialorder %v52, -1.0
    %vm63 = vcmp.ne.f32.partialorder %v53, -1.0
    %vm64 = vcmp.ne.f32.partialorder %v54, -1.0
    %vm65 = vcmp.ne.f32.partialorder %v55, -1.0
    %s66 = sadd.s32 %s45, 80
    %p67 = scmp.le.s32.totalorder %s66, 76
    // Predicated region
    $region14: #{tpu_custom_call.1} parent=1 // pred_check
      %p68 = pneg %p67
    $region15: #{tpu_custom_call.1} parent=1 // pred_check_branch
      %70 = sbr.rel (%p68) target = $region17
    $region16: #{tpu_custom_call.1} parent=1 // pred_region
      %v71 = vmul.f32 %v46, %v46
      %v72 = vmul.f32 %v47, %v47
      %v73 = vmul.f32 %v48, %v48
      %v74 = vmul.f32 %v49, %v49
      %v75 = vmul.f32 %v50, %v50
      %v76 = vmul.f32 %v51, %v51
      %v77 = vmul.f32 %v52, %v52
      %v78 = vmul.f32 %v53, %v53
      %v79 = vmul.f32 %v54, %v54
      %v80 = vmul.f32 %v55, %v55
      %v81 = vsel %vm56, %v71, 0.0
      %v82 = vsel %vm57, %v72, 0.0
      %v83 = vsel %vm58, %v73, 0.0
      %v84 = vsel %vm59, %v74, 0.0
      %v85 = vsel %vm60, %v75, 0.0
      %v86 = vsel %vm61, %v76, 0.0
      %v87 = vsel %vm62, %v77, 0.0
      %v88 = vsel %vm63, %v78, 0.0
      %v89 = vsel %vm64, %v79, 0.0
      %v90 = vsel %vm65, %v80, 0.0
      %v91 = vsel %vm56, 1, 0
      %v92 = vsel %vm57, 1, 0
      %v93 = vsel %vm58, 1, 0
      %v94 = vsel %vm59, 1, 0
      %v95 = vsel %vm60, 1, 0
      %v96 = vsel %vm61, 1, 0
      %v97 = vsel %vm62, 1, 0
      %v98 = vsel %vm63, 1, 0
      %v99 = vsel %vm64, 1, 0
      %v100 = vsel %vm65, 1, 0
      %v101 = vld [vmem:[#allocation2] sm:$0xff]
      %v102 = vld [vmem:[#allocation2 + $0x8] sm:$0xff]
      %v103 = vadd.f32 %v81, %v83
      %v104 = vadd.f32 %v103, %v85
      %v105 = vadd.f32 %v104, %v87
      %v106 = vadd.f32 %v105, %v89
      %v107 = vadd.f32 %v82, %v84
      %v108 = vadd.f32 %v107, %v86
      %v109 = vadd.f32 %v108, %v88
      %v110 = vadd.f32 %v109, %v90
      %v111 = vadd.f32 %v101, %v106
      %v112 = vadd.f32 %v102, %v110
      %113 = vst [vmem:[#allocation2] sm:$0xff] %v111
      %114 = vst [vmem:[#allocation2 + $0x8] sm:$0xff] %v112
      %v115 = vld [vmem:[#allocation3] sm:$0xff]
      %v116 = vld [vmem:[#allocation3 + $0x8] sm:$0xff]
      %v117 = vadd.s32 %v91, %v95
      %v118 = vadd.s32 %v93, %v97
      %v119 = vadd.s32 %v117, %v99
      %v120 = vadd.s32 %v119, %v118
      %v121 = vadd.s32 %v92, %v96
      %v122 = vadd.s32 %v94, %v98
      %v123 = vadd.s32 %v121, %v100
      %v124 = vadd.s32 %v123, %v122
      %v125 = vadd.s32 %v115, %v120
      %v126 = vadd.s32 %v116, %v124
      %127 = vst [vmem:[#allocation3] sm:$0xff] %v125
      %128 = vst [vmem:[#allocation3 + $0x8] sm:$0xff] %v126
    $region17: #{tpu_custom_call.1} parent=1 // pred_fallthru
      _
    %p129 = scmp.gt.s32.totalorder %s66, 76
    // Predicated region
    $region18: #{tpu_custom_call.1} parent=1 // pred_check
      %p130 = pneg %p129
    $region19: #{tpu_custom_call.1} parent=1 // pred_check_branch
      %132 = sbr.rel (%p130) target = $region21
    $region20: #{tpu_custom_call.1} parent=1 // pred_region
      %v133 = vlaneseq
      %v134 = vshrl.u32 %v133, 7
      %v135 = vadd.s32 %v134, 8
      %v136 = vadd.s32 %v134, 16
      %v137 = vadd.s32 %v134, 24
      %v138 = vadd.s32 %v134, 32
      %v139 = vadd.s32 %v134, 40
      %v140 = vadd.s32 %v134, 48
      %v141 = vadd.s32 %v134, 56
      %v142 = vadd.s32 %v134, 64
      %v143 = vadd.s32 %v134, 72
      %v144 = vstv %s45
      %v145 = vadd.s32 %v144, %v134
      %v146 = vadd.s32 %v144, %v135
      %v147 = vadd.s32 %v144, %v136
      %v148 = vadd.s32 %v144, %v137
      %v149 = vadd.s32 %v144, %v138
      %v150 = vadd.s32 %v144, %v139
      %v151 = vadd.s32 %v144, %v140
      %v152 = vadd.s32 %v144, %v141
      %v153 = vadd.s32 %v144, %v142
      %v154 = vadd.s32 %v144, %v143
      %vm155 = vcmp.lt.s32.totalorder %v145, 76
      %vm156 = vcmp.lt.s32.totalorder %v146, 76
      %vm157 = vcmp.lt.s32.totalorder %v147, 76
      %vm158 = vcmp.lt.s32.totalorder %v148, 76
      %vm159 = vcmp.lt.s32.totalorder %v149, 76
      %vm160 = vcmp.lt.s32.totalorder %v150, 76
      %vm161 = vcmp.lt.s32.totalorder %v151, 76
      %vm162 = vcmp.lt.s32.totalorder %v152, 76
      %vm163 = vcmp.lt.s32.totalorder %v153, 76
      %vm164 = vcmp.lt.s32.totalorder %v154, 76
      %vm165 = vmand %vm56, %vm155
      %vm166 = vmand %vm57, %vm156
      %vm167 = vmand %vm58, %vm157
      %vm168 = vmand %vm59, %vm158
      %vm169 = vmand %vm60, %vm159
      %vm170 = vmand %vm61, %vm160
      %vm171 = vmand %vm62, %vm161
      %vm172 = vmand %vm63, %vm162
      %vm173 = vmand %vm64, %vm163
      %vm174 = vmand %vm65, %vm164
      %v175 = vmul.f32 %v46, %v46
      %v176 = vmul.f32 %v47, %v47
      %v177 = vmul.f32 %v48, %v48
      %v178 = vmul.f32 %v49, %v49
      %v179 = vmul.f32 %v50, %v50
      %v180 = vmul.f32 %v51, %v51
      %v181 = vmul.f32 %v52, %v52
      %v182 = vmul.f32 %v53, %v53
      %v183 = vmul.f32 %v54, %v54
      %v184 = vmul.f32 %v55, %v55
      %v185 = vsel %vm165, %v175, 0.0
      %v186 = vsel %vm166, %v176, 0.0
      %v187 = vsel %vm167, %v177, 0.0
      %v188 = vsel %vm168, %v178, 0.0
      %v189 = vsel %vm169, %v179, 0.0
      %v190 = vsel %vm170, %v180, 0.0
      %v191 = vsel %vm171, %v181, 0.0
      %v192 = vsel %vm172, %v182, 0.0
      %v193 = vsel %vm173, %v183, 0.0
      %v194 = vsel %vm174, %v184, 0.0
      %v195 = vsel %vm165, 1, 0
      %v196 = vsel %vm166, 1, 0
      %v197 = vsel %vm167, 1, 0
      %v198 = vsel %vm168, 1, 0
      %v199 = vsel %vm169, 1, 0
      %v200 = vsel %vm170, 1, 0
      %v201 = vsel %vm171, 1, 0
      %v202 = vsel %vm172, 1, 0
      %v203 = vsel %vm173, 1, 0
      %v204 = vsel %vm174, 1, 0
      %v205 = vld [vmem:[#allocation2] sm:$0xff]
      %v206 = vld [vmem:[#allocation2 + $0x8] sm:$0xff]
      %v207 = vadd.f32 %v185, %v187
      %v208 = vadd.f32 %v207, %v189
      %v209 = vadd.f32 %v208, %v191
      %v210 = vadd.f32 %v209, %v193
      %v211 = vadd.f32 %v186, %v188
      %v212 = vadd.f32 %v211, %v190
      %v213 = vadd.f32 %v212, %v192
      %v214 = vadd.f32 %v213, %v194
      %v215 = vadd.f32 %v205, %v210
      %v216 = vadd.f32 %v206, %v214
      %217 = vst [vmem:[#allocation2] sm:$0xff] %v215
      %218 = vst [vmem:[#allocation2 + $0x8] sm:$0xff] %v216
      %v219 = vld [vmem:[#allocation3] sm:$0xff]
      %v220 = vld [vmem:[#allocation3 + $0x8] sm:$0xff]
      %v221 = vadd.s32 %v195, %v199
      %v222 = vadd.s32 %v197, %v201
      %v223 = vadd.s32 %v221, %v203
      %v224 = vadd.s32 %v223, %v222
      %v225 = vadd.s32 %v196, %v200
      %v226 = vadd.s32 %v198, %v202
      %v227 = vadd.s32 %v225, %v204
      %v228 = vadd.s32 %v227, %v226
      %v229 = vadd.s32 %v219, %v224
      %v230 = vadd.s32 %v220, %v228
      %231 = vst [vmem:[#allocation3] sm:$0xff] %v229
      %232 = vst [vmem:[#allocation3 + $0x8] sm:$0xff] %v230
    $region21: #{tpu_custom_call.1} parent=1 // pred_fallthru
      _
    // Predicated region
    $region22: #{tpu_custom_call.1} parent=1 // pred_check
      %p233 = pneg %p36
    $region23: #{tpu_custom_call.1} parent=1 // pred_check_branch
      %235 = sbr.rel (%p233) target = $region25
    $region24: #{tpu_custom_call.1} parent=1 // pred_region
      %v236 = vld [vmem:[#allocation2] sm:$0xff]
      %v237 = vld [vmem:[#allocation2 + $0x8] sm:$0xff]
      %v238 = vadd.f32 %v236, %v237
      %239 = vst [vmem:[#allocation7] sm:$0xff] %v238
      %v240 = vld [vmem:[#allocation3] sm:$0xff]
      %v241 = vld [vmem:[#allocation3 + $0x8] sm:$0xff]
      %v242 = vadd.s32 %v240, %v241
      %243 = vst [vmem:[#allocation8] sm:$0xff] %v242
    $region25: #{tpu_custom_call.1} parent=1 // pred_fallthru
      _
    // Predicated region
    $region26: #{tpu_custom_call.1} parent=1 // pred_check
      _
    $region27: #{tpu_custom_call.1} parent=1 // pred_check_branch
      %245 = sbr.rel (0) target = $region29
    $region28: #{tpu_custom_call.1} parent=1 // pred_region
      %s247 = ssub.s32 128, 128
      %248 = vsyncadd [#allocation6], %s247
      %s250 = sshll.u32 [#allocation7], 4
      %s251 = int_to_ptr.vmem [resolvable:$true] %s250
      %253 = dma.vmem_to_hbm [thread:$0]  %s251, 128, %s1, [#allocation6]
    $region29: #{tpu_custom_call.1} parent=1 // pred_fallthru
      _
    // Predicated region
    $region30: #{tpu_custom_call.1} parent=1 // pred_check
      _
    $region31: #{tpu_custom_call.1} parent=1 // pred_check_branch
      %255 = sbr.rel (0) target = $region33
    $region32: #{tpu_custom_call.1} parent=1 // pred_region
      %s257 = ssub.s32 128, 128
      %258 = vsyncadd [#allocation9], %s257
      %s260 = sshll.u32 [#allocation8], 4
      %s261 = int_to_ptr.vmem [resolvable:$true] %s260
      %263 = dma.vmem_to_hbm [thread:$0]  %s261, 128, %s2, [#allocation9]
    $region33: #{tpu_custom_call.1} parent=1 // pred_fallthru
      _
    // Predicated region
    $region34: #{tpu_custom_call.1} parent=1 // pred_check
      _
    $region35: #{tpu_custom_call.1} parent=1 // pred_check_branch
      %265 = sbr.rel (0) target = $region37
    $region36: #{tpu_custom_call.1} parent=1 // pred_region
      %266 = dma.done [#allocation6], 128
    $region37: #{tpu_custom_call.1} parent=1 // pred_fallthru
      _
    // Predicated region
    $region38: #{tpu_custom_call.1} parent=1 // pred_check
      _
    $region39: #{tpu_custom_call.1} parent=1 // pred_check_branch
      %268 = sbr.rel (0) target = $region41
    $region40: #{tpu_custom_call.1} parent=1 // pred_region
      %269 = dma.done [#allocation9], 128
    $region41: #{tpu_custom_call.1} parent=1 // pred_fallthru
      _
    %270 = vsyncpa [#allocation5], 1
    %271 = vsyncpa [#allocation6], 1
    %272 = vsyncpa [#allocation9], 1

</llo_original>
